<compile_context>
chip_gen: v6e
topology: v6e:2x2x1
jax: 0.10.0
libtpu: 0.0.40
codegen_flags: <defaults>
</compile_context>

<pallas_src>
import jax
import jax.numpy as jnp
from jax.experimental import pallas as pl
from jax.experimental.pallas import tpu as pltpu


def value_kernel(x_ref, w1_ref, b1_ref, w2_ref, b2_ref, out_ref):
    # x:  (TB, D)    w1: (D, H)    b1: (1, H)
    # w2: (1, H)     b2: (1, 1) in SMEM      out: (TB, 1)
    x = x_ref[...]

    # fc1 + tanh (MXU matmul, f32 accumulate; tanh on EUP).
    h = jnp.dot(x, w1_ref[...], preferred_element_type=jnp.float32) + b1_ref[...]
    h = jnp.tanh(h)

    # fc2 with out_features == 1: VPU multiply + lane reduction instead of an
    # N=1 MXU matmul.  b2 is a scalar read from SMEM.
    out = jnp.sum(h * w2_ref[...], axis=-1, keepdims=True) + b2_ref[0, 0]
    out_ref[...] = out.astype(out_ref.dtype)


def value_forward(x, w1, b1, w2, b2, *, block_b=512):
    """Fused Value-head forward.  x: (B, D) obs; returns (B, 1) values."""
    # preprocess_obs_fn: convert observations to a float tensor.
    x = jnp.asarray(x, dtype=jnp.float32)
    B, D = x.shape
    H = w1.shape[1]

    # Batch tile: whole batch if small, otherwise block_b rows per grid step.
    # block_b is a multiple of 8 so tiled block shapes satisfy the (8, 128)
    # sublane rule; tb == B (full dim) is always legal.
    tb = B if B <= block_b else block_b
    nb = pl.cdiv(B, tb)

    grid_spec = pltpu.PrefetchScalarGridSpec(
        num_scalar_prefetch=0,
        grid=(nb,),
        in_specs=[
            # x: one (tb, D) tile per grid step (double-buffered by Pallas).
            pl.BlockSpec((tb, D), lambda i: (i, 0)),
            # Weights / biases: constant block index -> stay VMEM-resident.
            pl.BlockSpec((D, H), lambda i: (0, 0)),
            pl.BlockSpec((1, H), lambda i: (0, 0)),
            pl.BlockSpec((1, H), lambda i: (0, 0)),
            # b2: scalar in SMEM.
            pl.BlockSpec(memory_space=pltpu.MemorySpace.SMEM),
        ],
        out_specs=pl.BlockSpec((tb, 1), lambda i: (i, 0)),
    )

    return pl.pallas_call(
        value_kernel,
        out_shape=jax.ShapeDtypeStruct((B, 1), jnp.float32),
        grid_spec=grid_spec,
        compiler_params=pltpu.CompilerParams(
            dimension_semantics=("parallel",),
        ),
    )(x, w1, b1.reshape(1, H), w2.reshape(1, H), b2.reshape(1, 1))


def init_params(key, input_dim, hidden=64):
    # Deterministic init mimicking torch.nn.Linear defaults:
    # uniform(-1/sqrt(fan_in), 1/sqrt(fan_in)) for weight and bias.
    k1, k2, k3, k4 = jax.random.split(key, 4)
    lim1 = 1.0 / jnp.sqrt(input_dim)
    lim2 = 1.0 / jnp.sqrt(hidden)
    w1 = jax.random.uniform(k1, (input_dim, hidden), jnp.float32, -lim1, lim1)
    b1 = jax.random.uniform(k2, (hidden,), jnp.float32, -lim1, lim1)
    w2 = jax.random.uniform(k3, (hidden, 1), jnp.float32, -lim2, lim2)
    b2 = jax.random.uniform(k4, (1,), jnp.float32, -lim2, lim2)
    return w1, b1, w2, b2


if __name__ == "__main__":
    key = jax.random.PRNGKey(0)
    k_x, k_x2, k_p = jax.random.split(key, 3)

    input_dim = 32  # `input_shape` of the environment observation space
    w1, b1, w2, b2 = init_params(k_p, input_dim)

    def reference(xx):
        xx = jnp.asarray(xx, jnp.float32)
        return jnp.tanh(xx @ w1 + b1) @ w2 + b2

    # Case 1: tiny batch, single grid step.
    batch = 8
    x = jax.random.normal(k_x, (batch, input_dim), dtype=jnp.float32)
    out = jax.block_until_ready(value_forward(x, w1, b1, w2, b2))
    assert out.shape == (batch, 1)
    assert jnp.allclose(out, reference(x), atol=1e-5, rtol=1e-5)

    # Case 2: multi-step grid (VMEM-resident weights, tiled batch).
    batch2 = 48
    x2 = jax.random.normal(k_x2, (batch2, input_dim), dtype=jnp.float32)
    out2 = jax.block_until_ready(value_forward(x2, w1, b1, w2, b2, block_b=16))
    assert out2.shape == (batch2, 1)
    assert jnp.allclose(out2, reference(x2), atol=1e-5, rtol=1e-5)

    print("KERNEL_OK")
</pallas_src>

<mosaic_0001>
module attributes {stable_mosaic.version = 11 : i64} {
  func.func @value_kernel(%arg0: i32, %arg1: memref<8x32xf32, #tpu.memory_space<vmem>>, %arg2: memref<32x64xf32, #tpu.memory_space<vmem>>, %arg3: memref<1x64xf32, #tpu.memory_space<vmem>>, %arg4: memref<1x64xf32, #tpu.memory_space<vmem>>, %arg5: memref<1x1xf32, #tpu.memory_space<smem>>, %arg6: memref<8x1xf32, #tpu.memory_space<vmem>>) attributes {dimension_semantics = [#tpu.dimension_semantics<parallel>], iteration_bounds = array<i64: 1>, scalar_prefetch = 0 : i64, scratch_operands = 0 : i64, tpu.core_type = #tpu.core_type<tc>, window_params = [{transform_indices = @transform_0, window_bounds = array<i64: 8, 32>}, {pipeline_mode = #tpu.pipeline_mode<synchronous>, transform_indices = @transform_1, window_bounds = array<i64: 32, 64>}, {pipeline_mode = #tpu.pipeline_mode<synchronous>, transform_indices = @transform_2, window_bounds = array<i64: 1, 64>}, {pipeline_mode = #tpu.pipeline_mode<synchronous>, transform_indices = @transform_3, window_bounds = array<i64: 1, 64>}, {transform_indices = @transform_4, window_bounds = array<i64: 1, 1>}, {transform_indices = @transform_5, window_bounds = array<i64: 8, 1>}]} {
    %c0 = arith.constant 0 : index
    %c0_0 = arith.constant 0 : index
    %0 = vector.load %arg1[%c0, %c0_0] : memref<8x32xf32, #tpu.memory_space<vmem>>, vector<8x32xf32>
    %c0_1 = arith.constant 0 : index
    %c0_2 = arith.constant 0 : index
    %1 = vector.load %arg2[%c0_1, %c0_2] : memref<32x64xf32, #tpu.memory_space<vmem>>, vector<32x64xf32>
    %cst = arith.constant dense<0.000000e+00> : vector<8x64xf32>
    %2 = tpu.matmul %0, %1, %cst {dimension_numbers = #tpu.dot_dimension_numbers<[1], [0], [0], [1], [0, 0, 1, 1], [], []>} : vector<8x32xf32>, vector<32x64xf32>, vector<8x64xf32> -> vector<8x64xf32>
    %c0_3 = arith.constant 0 : index
    %c0_4 = arith.constant 0 : index
    %3 = vector.load %arg3[%c0_3, %c0_4] : memref<1x64xf32, #tpu.memory_space<vmem>>, vector<1x64xf32>
    %4 = vector.broadcast %3 : vector<1x64xf32> to vector<8x64xf32>
    %5 = arith.addf %2, %4 : vector<8x64xf32>
    %6 = math.tanh %5 : vector<8x64xf32>
    %c0_5 = arith.constant 0 : index
    %c0_6 = arith.constant 0 : index
    %7 = vector.load %arg4[%c0_5, %c0_6] : memref<1x64xf32, #tpu.memory_space<vmem>>, vector<1x64xf32>
    %8 = vector.broadcast %7 : vector<1x64xf32> to vector<8x64xf32>
    %9 = arith.mulf %6, %8 : vector<8x64xf32>
    %cst_7 = arith.constant dense<0.000000e+00> : vector<8xf32>
    %10 = vector.multi_reduction <add>, %9, %cst_7 [1] : vector<8x64xf32> to vector<8xf32>
    %11 = vector.shape_cast %10 : vector<8xf32> to vector<8x1xf32>
    %c0_8 = arith.constant 0 : index
    %c0_9 = arith.constant 0 : index
    %12 = memref.load %arg5[%c0_8, %c0_9] : memref<1x1xf32, #tpu.memory_space<smem>>
    %13 = vector.broadcast %12 : f32 to vector<8x1xf32>
    %14 = arith.addf %11, %13 : vector<8x1xf32>
    %c0_10 = arith.constant 0 : index
    %c0_11 = arith.constant 0 : index
    %15 = vector.load %arg6[%c0_10, %c0_11] : memref<8x1xf32, #tpu.memory_space<vmem>>, vector<8x1xf32>
    tpu.vector_store %arg6[%c0_10, %c0_11], %14 {strides = array<i32>} : memref<8x1xf32, #tpu.memory_space<vmem>>, vector<8x1xf32>,
    return
  }
  func.func @transform_0(%arg0: i32) -> (i32, i32) {
    %c0_i32 = arith.constant 0 : i32
    %c0_i32_0 = arith.constant 0 : i32
    return %arg0, %c0_i32 : i32, i32
  }
  func.func @transform_1(%arg0: i32) -> (i32, i32) {
    %c0_i32 = arith.constant 0 : i32
    %c0_i32_0 = arith.constant 0 : i32
    %c0_i32_1 = arith.constant 0 : i32
    return %c0_i32, %c0_i32_0 : i32, i32
  }
  func.func @transform_2(%arg0: i32) -> (i32, i32) {
    %c0_i32 = arith.constant 0 : i32
    %c0_i32_0 = arith.constant 0 : i32
    %c0_i32_1 = arith.constant 0 : i32
    return %c0_i32, %c0_i32_0 : i32, i32
  }
  func.func @transform_3(%arg0: i32) -> (i32, i32) {
    %c0_i32 = arith.constant 0 : i32
    %c0_i32_0 = arith.constant 0 : i32
    %c0_i32_1 = arith.constant 0 : i32
    return %c0_i32, %c0_i32_0 : i32, i32
  }
  func.func @transform_4(%arg0: i32) -> (i32, i32) {
    %c0_i32 = arith.constant 0 : i32
    %c0_i32_0 = arith.constant 0 : i32
    %c0_i32_1 = arith.constant 0 : i32
    return %c0_i32, %c0_i32_0 : i32, i32
  }
  func.func @transform_5(%arg0: i32) -> (i32, i32) {
    %c0_i32 = arith.constant 0 : i32
    %c0_i32_0 = arith.constant 0 : i32
    return %arg0, %c0_i32 : i32, i32
  }
}

</mosaic_0001>

<llo_original>
// kernel: tpu_custom_call.1
$region0: #{tpu_custom_call.1}
  #allocation0 [shape = 'u32[]', space=smem, size = 0x4, offset = 0x4, fixed_abs, tag = 'smem constant byte address 0x4 - core index']
  #allocation1 [shape = 'u32[144,128]{1,0:T(1,128)}', space=vmem, size = 0x12000, scoped, tag = 'internal scratch']
  #allocation2 [shape = 'f32[1,1]{1,0:T(1,128)S(6)}', space=smem, size = 0x200, scoped, tag = 'scoped memory for tpu_custom_call.1']
  %s0 = inlined_call_operand.hbm [shape: f32[8,32], index: 0, kind: input, shape index: {}]
  %s1 = inlined_call_operand.hbm [shape: f32[32,64], index: 1, kind: input, shape index: {}]
  %s2 = inlined_call_operand.vmem [shape: f32[1,64], index: 2, kind: input, shape index: {}]
  %s3 = inlined_call_operand.vmem [shape: f32[1,64], index: 3, kind: input, shape index: {}]
  %s4 = inlined_call_operand.<no memory space> [shape: f32[1,1], index: 4, kind: input, shape index: {}]
  %s5 = inlined_call_operand.vmem [shape: f32[8,1], index: 5, kind: output, shape index: {}]
  %s6 = sld [smem:[#allocation0]]
  $region38: #{tpu_custom_call.1} parent=0
    _
  %s8 = ssub.s32 1, %s6
  %s9 = scalar_select 0, %s8, %s6
  %10 = sst [smem:[#allocation2]] %s4
  $region1: #{tpu_custom_call.1} parent=0
    #allocation3 [shape = 'u8[4096]{0}', space=vmem, size = 0x1000, scoped, tag = 'input window, operand 0, single buffered']
    #allocation4 [shape = 's32[1]{0}', space=sflag, size = 0x4, scoped, tag = 'scoped memory for tpu_custom_call.1']
    #allocation5 [shape = 'u8[16384]{0}', space=vmem, size = 0x4000, scoped, tag = 'input window, operand 1, single buffered']
    #allocation6 [shape = 's32[1]{0}', space=sflag, size = 0x4, scoped, tag = 'scoped memory for tpu_custom_call.1']
    %11 = vsyncpa [#allocation4], 0
    %12 = vsyncpa [#allocation6], 0
    // Predicated region
    $region2: #{tpu_custom_call.1} parent=1 // pred_check
      _
    $region3: #{tpu_custom_call.1} parent=1 // pred_check_branch
      %14 = sbr.rel (0) target = $region5
    $region4: #{tpu_custom_call.1} parent=1 // pred_region
      %s16 = ssub.s32 128, 128
      %17 = vsyncadd [#allocation4], %s16
      %s19 = sshll.u32 [#allocation3], 4
      %s20 = int_to_ptr.vmem [resolvable:$true] %s19
      %22 = dma.hbm_to_vmem [thread:$0]  %s0, 128, %s20, [#allocation4]
    $region5: #{tpu_custom_call.1} parent=1 // pred_fallthru
      _
    // Predicated region
    $region6: #{tpu_custom_call.1} parent=1 // pred_check
      _
    $region7: #{tpu_custom_call.1} parent=1 // pred_check_branch
      %24 = sbr.rel (0) target = $region9
    $region8: #{tpu_custom_call.1} parent=1 // pred_region
      %s26 = ssub.s32 512, 512
      %27 = vsyncadd [#allocation6], %s26
      %s28 = sshll.u32 [#allocation5], 4
      %s29 = int_to_ptr.vmem [resolvable:$true] %s28
      %34 = dma.hbm_to_vmem [thread:$0]  %s1, 512, %s29, [#allocation6], 128, 128, 8
    $region9: #{tpu_custom_call.1} parent=1 // pred_fallthru
      _
    // Predicated region
    $region10: #{tpu_custom_call.1} parent=1 // pred_check
      _
    $region11: #{tpu_custom_call.1} parent=1 // pred_check_branch
      %36 = sbr.rel (0) target = $region13
    $region12: #{tpu_custom_call.1} parent=1 // pred_region
      _
    $region13: #{tpu_custom_call.1} parent=1 // pred_fallthru
      _
    // Predicated region
    $region14: #{tpu_custom_call.1} parent=1 // pred_check
      _
    $region15: #{tpu_custom_call.1} parent=1 // pred_check_branch
      %38 = sbr.rel (0) target = $region17
    $region16: #{tpu_custom_call.1} parent=1 // pred_region
      _
    $region17: #{tpu_custom_call.1} parent=1 // pred_fallthru
      _
    // Predicated region
    $region18: #{tpu_custom_call.1} parent=1 // pred_check
      _
    $region19: #{tpu_custom_call.1} parent=1 // pred_check_branch
      %40 = sbr.rel (0) target = $region21
    $region20: #{tpu_custom_call.1} parent=1 // pred_region
      _
    $region21: #{tpu_custom_call.1} parent=1 // pred_fallthru
      _
    // Predicated region
    $region22: #{tpu_custom_call.1} parent=1 // pred_check
      _
    $region23: #{tpu_custom_call.1} parent=1 // pred_check_branch
      %42 = sbr.rel (0) target = $region25
    $region24: #{tpu_custom_call.1} parent=1 // pred_region
      %43 = dma.done [#allocation4], 128
    $region25: #{tpu_custom_call.1} parent=1 // pred_fallthru
      _
    // Predicated region
    $region26: #{tpu_custom_call.1} parent=1 // pred_check
      _
    $region27: #{tpu_custom_call.1} parent=1 // pred_check_branch
      %45 = sbr.rel (0) target = $region29
    $region28: #{tpu_custom_call.1} parent=1 // pred_region
      %46 = dma.done [#allocation6], 512
    $region29: #{tpu_custom_call.1} parent=1 // pred_fallthru
      _
    %v47 = vld [vmem:[#allocation3] sm:$0xff]
    %v48 = vld [vmem:[#allocation5] sm:$0xff]
    %v49 = vld [vmem:[#allocation5 + $0x8] sm:$0xff]
    %v50 = vld [vmem:[#allocation5 + $0x10] sm:$0xff]
    %v51 = vld [vmem:[#allocation5 + $0x18] sm:$0xff]
    %v52 = vld [vmem:[%s2] sm:$0x1]
    %v54 = vlaneseq
    %v55 = vshrl.u32 %v54, 7
    %v56 = vsub.s32 0, %v55
    %v57 = vrot.slane %v52, %v56
    %vm59 = vcmask 261120
    %v61 = vsel %vm59, %v47, 0
    %63 = vmatprep.subr.mxu0 0.0
    %64 = vmatpush1.msra.mxu0 0.0
    %65 = vmatprep.subr.mxu0 0.0
    %66 = vmatpush1.msra.mxu0 0.0
    %67 = vmatprep.subr.mxu0 0.0
    %68 = vmatpush1.msra.mxu0 0.0
    %69 = vmatprep.subr.mxu0 0.0
    %70 = vmatpush1.msra.mxu0 0.0
    %71 = vmatprep.subr.mxu0 0.0
    %72 = vmatpush1.msra.mxu0 0.0
    %73 = vmatprep.subr.mxu0 0.0
    %74 = vmatpush1.msra.mxu0 0.0
    %75 = vmatprep.subr.mxu0 0.0
    %76 = vmatpush1.msra.mxu0 0.0
    %77 = vmatprep.subr.mxu0 0.0
    %78 = vmatpush1.msra.mxu0 0.0
    %79 = vmatprep.subr.mxu0 0.0
    %80 = vmatpush1.msra.mxu0 0.0
    %81 = vmatprep.subr.mxu0 0.0
    %82 = vmatpush1.msra.mxu0 0.0
    %83 = vmatprep.subr.mxu0 0.0
    %84 = vmatpush1.msra.mxu0 0.0
    %85 = vmatprep.subr.mxu0 0.0
    %86 = vmatpush1.msra.mxu0 0.0
    %87 = vmatprep.subr.mxu0 0.0
    %88 = vmatpush1.msra.mxu0 %v51
    %89 = vmatprep.subr.mxu0 0.0
    %90 = vmatpush1.msra.mxu0 %v50
    %91 = vmatprep.subr.mxu0 0.0
    %92 = vmatpush1.msra.mxu0 %v49
    %93 = vmatprep.subr.mxu0 0.0
    %94 = vmatpush1.msra.mxu0 %v48
    %95 = vmatprep.subr.mxu0 0.0
    %96 = vmatpush2.msra.mxu0 0.0
    %97 = vmatprep.subr.mxu0 0.0
    %98 = vmatpush2.msra.mxu0 0.0
    %99 = vmatprep.subr.mxu0 0.0
    %100 = vmatpush2.msra.mxu0 0.0
    %101 = vmatprep.subr.mxu0 0.0
    %102 = vmatpush2.msra.mxu0 0.0
    %103 = vmatprep.subr.mxu0 0.0
    %104 = vmatpush2.msra.mxu0 0.0
    %105 = vmatprep.subr.mxu0 0.0
    %106 = vmatpush2.msra.mxu0 0.0
    %107 = vmatprep.subr.mxu0 0.0
    %108 = vmatpush2.msra.mxu0 0.0
    %109 = vmatprep.subr.mxu0 0.0
    %110 = vmatpush2.msra.mxu0 0.0
    %111 = vmatprep.subr.mxu0 0.0
    %112 = vmatpush2.msra.mxu0 0.0
    %113 = vmatprep.subr.mxu0 0.0
    %114 = vmatpush2.msra.mxu0 0.0
    %115 = vmatprep.subr.mxu0 0.0
    %116 = vmatpush2.msra.mxu0 0.0
    %117 = vmatprep.subr.mxu0 0.0
    %118 = vmatpush2.msra.mxu0 0.0
    %119 = vmatprep.subr.mxu0 0.0
    %120 = vmatpush2.msra.mxu0 0.0
    %121 = vmatprep.subr.mxu0 0.0
    %122 = vmatpush2.msra.mxu0 0.0
    %123 = vmatprep.subr.mxu0 0.0
    %124 = vmatpush2.msra.mxu0 0.0
    %125 = vmatprep.subr.mxu0 0.0
    %126 = vmatpush2.msra.mxu0 0.0
    %127 = vmatprep.mubr.f32.mxu0 0.0
    %128 = vmatmul.mubr.f32.gmra.mxu0 %v61
    %v129 = vpop.f32.mrf.mxu0
    %v130 = vadd.f32 %v57, %v129
    %v131 = vpop.f32.mrf.mxu0
    %132 = vdwg.mxu0
    %v133 = vtanh.pop %v130
    %v134 = vld [vmem:[%s3] sm:$0x1]
    %v136 = vlaneseq
    %v137 = vshrl.u32 %v136, 7
    %v138 = vsub.s32 0, %v137
    %v139 = vrot.slane %v134, %v138
    %v141 = vmul.f32 %v133, %v139
    %vm142 = vcmask 523264
    %v143 = vsel %vm142, %v141, 0.0
    %144 = vadd.xlane.f32.xlu0 %v143
    %v145 = vpop.xlane.xlu0 %144
    %s146 = sld [smem:[#allocation2]]
    %v147 = vstv %s146
    %v148 = vadd.f32 %v145, %v147
    %vm149 = vcmask 7168
    %150 = vst.msk [vmem:[%s5] sm:$0xff] %vm149, %v148
    // Predicated region
    $region30: #{tpu_custom_call.1} parent=1 // pred_check
      _
    $region31: #{tpu_custom_call.1} parent=1 // pred_check_branch
      %152 = sbr.rel (0) target = $region33
    $region32: #{tpu_custom_call.1} parent=1 // pred_region
      _
    $region33: #{tpu_custom_call.1} parent=1 // pred_fallthru
      _
    // Predicated region
    $region34: #{tpu_custom_call.1} parent=1 // pred_check
      _
    $region35: #{tpu_custom_call.1} parent=1 // pred_check_branch
      %154 = sbr.rel (0) target = $region37
    $region36: #{tpu_custom_call.1} parent=1 // pred_region
      _
    $region37: #{tpu_custom_call.1} parent=1 // pred_fallthru
      _
    %155 = vsyncpa [#allocation4], 1
    %156 = vsyncpa [#allocation6], 1

</llo_original>
